<compile_context>
chip_gen: v7x
topology: tpu7x:2x2x1
jax: 0.10.0
libtpu: 0.0.40
codegen_flags: <defaults>
</compile_context>

<pallas_src>
import functools

import jax
import jax.numpy as jnp
from jax.experimental import pallas as pl
from jax.experimental.pallas import tpu as pltpu

_C = 64          # module input channels (conv1_da: 64 -> 32)
_C_SPLITS = 2    # channel halves streamed as parallel grid blocks
_C_HALF = _C // _C_SPLITS


def _round_up(x, m):
    return (x + m - 1) // m * m


# --------------------------------------------------------------------------
# Phase 1: streamed global average pool (the HBM-bound part).
# --------------------------------------------------------------------------
def _gap_kernel(x_ref, o_ref, acc_ref, *, hw, tile_hw, hw_steps, inv_hw):
    # x_ref  : (tile_n, 32, tile_hw) streamed input block (f32 or bf16)
    # o_ref  : (1, tile_n, 32) f32 pooled means, resident across the HW axis
    # acc_ref: (tile_n, 32, 128) f32 running 128-lane partial sums (scratch)
    k = pl.program_id(2)

    @pl.when(k == 0)
    def _zero():
        acc_ref[...] = jnp.zeros_like(acc_ref)

    def _accumulate_full_chunks(n_chunks):
        # Per-chunk slices straight off the ref, folded into the resident
        # accumulator: no block-sized value, minimal vreg pressure, per-chunk
        # upcast if x is streamed as bf16.
        for j in range(n_chunks):
            acc_ref[...] += x_ref[:, :, j * 128:(j + 1) * 128].astype(jnp.float32)

    if hw_steps > 1:
        # Interior HW tiles: tile_hw is a multiple of 128 and fully valid.
        @pl.when(k < hw_steps - 1)
        def _interior():
            _accumulate_full_chunks(tile_hw // 128)

    @pl.when(k == hw_steps - 1)
    def _last_and_finalize():
        # The last HW tile may be ragged (x is NOT padded in HBM): only its
        # statically-known valid lanes are read, so the stale lanes of the
        # partially-filled block never reach the pooled sum.
        valid = hw - (hw_steps - 1) * tile_hw          # static, 1..tile_hw
        n_full, rem = divmod(valid, 128)
        _accumulate_full_chunks(n_full)
        pooled = jnp.sum(acc_ref[...], axis=-1)        # single cross-lane reduce
        if rem:
            tail = x_ref[:, :, n_full * 128:n_full * 128 + rem].astype(jnp.float32)
            pooled = pooled + jnp.sum(tail, axis=-1)
        o_ref[0] = pooled * inv_hw                     # global average pool


# --------------------------------------------------------------------------
# Phase 2: tiny fused head: 1x1 conv 64->32 + ReLU, 1x1 conv 32->1, sigmoid.
# --------------------------------------------------------------------------
def _head_kernel(p_ref, w1_ref, b1_ref, w2_ref, b2_ref, o_ref):
    t = jnp.dot(p_ref[...], w1_ref[...], preferred_element_type=jnp.float32)
    t = jnp.maximum(t + b1_ref[...], 0.0)
    y = jnp.dot(t, w2_ref[...], preferred_element_type=jnp.float32) + b2_ref[...]
    o_ref[...] = jax.nn.sigmoid(y)


def domain_adaptation_forward(x, w1, b1, w2, b2, *, tile_hw_target=8192):
    """x: (N, 64, H, W) NCHW (f32 or bf16) -> sigmoid(DAImgHead(GAP(x))): (N, 1, 1, 1) f32."""
    N, C, H, W = x.shape
    assert C == _C, f"DAImgHead expects {_C} input channels, got {C}"
    HW = H * W
    x_flat = x.reshape(N, C, HW)          # layout-preserving view, no HBM copy

    # ---- HW (reduction) tiling: balanced steps, never padded in HBM --------
    hw_steps = pl.cdiv(HW, tile_hw_target)
    tile_hw = _round_up(pl.cdiv(HW, hw_steps), 128)
    if tile_hw >= HW:                      # one step covers everything
        tile_hw, hw_steps = HW, 1          # full-extent block (legal for any HW)
    else:
        hw_steps = pl.cdiv(HW, tile_hw)    # last step may be ragged (kernel masks it)

    # ---- batch tiling: partial last tile is fine (masked writeback) --------
    tile_n = min(N, 8)                     # multiple-of-8 or full-dim -> legal out spec
    n_tiles = pl.cdiv(N, tile_n)

    inv_hw = 1.0 / float(HW)
    w1 = w1.astype(jnp.float32)                    # (64, 32)
    b1 = b1.reshape(1, -1).astype(jnp.float32)     # (1, 32)
    w2 = w2.astype(jnp.float32)                    # (32, 1)
    b2 = b2.reshape(1, 1).astype(jnp.float32)      # (1, 1)

    # Raise the scoped VMEM limit above the v5e/v6e 16/32 MiB defaults so the
    # double-buffered streamed blocks fit; stays well under v7x's 64 MiB.
    itemsize = jnp.dtype(x_flat.dtype).itemsize
    x_block_bytes = tile_n * _C_HALF * tile_hw * itemsize
    acc_bytes = tile_n * _C_HALF * 128 * 4
    vmem_limit = int(min(max(2 * (2 * x_block_bytes + acc_bytes) + (4 << 20),
                             32 << 20), 64 << 20))

    gap = functools.partial(_gap_kernel, hw=HW, tile_hw=tile_hw,
                            hw_steps=hw_steps, inv_hw=inv_hw)

    cost = pl.CostEstimate(
        flops=int(N * C * HW + 2 * N * C * 32 + 2 * N * 32),
        transcendentals=int(N),
        bytes_accessed=int(N * C * HW * itemsize + _C_SPLITS * N * _C_HALF * 4),
    )

    pooled_parts = pl.pallas_call(
        gap,
        out_shape=jax.ShapeDtypeStruct((_C_SPLITS, N, _C_HALF), jnp.float32),
        grid_spec=pltpu.PrefetchScalarGridSpec(
            num_scalar_prefetch=0,
            grid=(_C_SPLITS, n_tiles, hw_steps),
            in_specs=[
                pl.BlockSpec((tile_n, _C_HALF, tile_hw), lambda c, i, k: (i, c, k)),
            ],
            out_specs=pl.BlockSpec((1, tile_n, _C_HALF), lambda c, i, k: (c, i, 0)),
            scratch_shapes=[pltpu.VMEM((tile_n, _C_HALF, 128), jnp.float32)],
        ),
        compiler_params=pltpu.CompilerParams(
            dimension_semantics=("parallel", "parallel", "arbitrary"),
            vmem_limit_bytes=vmem_limit,
        ),
        cost_estimate=cost,
    )(x_flat)

    # (2, N, 32) -> (N, 64): tiny (N*256 B) shuffle between the two kernels.
    pooled = jnp.transpose(pooled_parts, (1, 0, 2)).reshape(N, C)

    out = pl.pallas_call(
        _head_kernel,
        out_shape=jax.ShapeDtypeStruct((N, 1), jnp.float32),
        grid_spec=pltpu.PrefetchScalarGridSpec(
            num_scalar_prefetch=0,
            grid=(1,),
            in_specs=[
                pl.BlockSpec((N, C), lambda i: (0, 0)),
                pl.BlockSpec((C, 32), lambda i: (0, 0)),
                pl.BlockSpec((1, 32), lambda i: (0, 0)),
                pl.BlockSpec((32, 1), lambda i: (0, 0)),
                pl.BlockSpec((1, 1), lambda i: (0, 0)),
            ],
            out_specs=pl.BlockSpec((N, 1), lambda i: (0, 0)),
        ),
    )(pooled, w1, b1, w2, b2)

    return out.reshape(N, 1, 1, 1)


def reference_forward(x, w1, b1, w2, b2):
    """Pure-JAX reference mirroring the PyTorch module."""
    pooled = jnp.mean(x.astype(jnp.float32), axis=(2, 3))   # (N, 64)
    t = jnp.maximum(pooled @ w1 + b1, 0.0)                  # (N, 32)
    y = t @ w2 + b2                                         # (N, 1)
    return jax.nn.sigmoid(y).reshape(x.shape[0], 1, 1, 1)


if __name__ == "__main__":
    key = jax.random.PRNGKey(0)
    k_x, k_w1, k_w2 = jax.random.split(key, 3)

    # Parameters as in DAImgHead.__init__: normal(std=0.001) weights, zero biases,
    # stored in matmul layout (w1 = conv1_da weight 64->32, w2 = conv2_da 32->1).
    w1 = 0.001 * jax.random.normal(k_w1, (64, 32), dtype=jnp.float32)
    b1 = jnp.zeros((32,), dtype=jnp.float32)
    w2 = 0.001 * jax.random.normal(k_w2, (32, 1), dtype=jnp.float32)
    b2 = jnp.zeros((1,), dtype=jnp.float32)

    cases = [
        # primary small case consistent with the module: N=2, C=64, H=W=16
        ((2, 64, 16, 16), {}),
        # multi-step HW reduction with a ragged last HW tile (HW=130, tile=128)
        ((3, 64, 10, 13), dict(tile_hw_target=128)),
        # partial batch tile (N=10 > 8) + single ragged full-extent HW block
        ((10, 64, 12, 11), dict(tile_hw_target=256)),
    ]

    for idx, (shape, kwargs) in enumerate(cases):
        kx = jax.random.fold_in(k_x, idx)
        x = jax.random.normal(kx, shape, dtype=jnp.float32)

        out = domain_adaptation_forward(x, w1, b1, w2, b2, **kwargs)
        out = jax.block_until_ready(out)

        ref = reference_forward(x, w1, b1, w2, b2)
        assert out.shape == (shape[0], 1, 1, 1), (out.shape, shape)
        assert jnp.allclose(out, ref, atol=1e-5, rtol=1e-5), (shape, out, ref)

    print("KERNEL_OK")
</pallas_src>

<mosaic_0001>
module attributes {stable_mosaic.version = 11 : i64} {
  func.func @_gap_kernel(%arg0: i32, %arg1: i32, %arg2: i32, %arg3: memref<2x32x256xf32, #tpu.memory_space<vmem>>, %arg4: memref<1x2x32xf32, #tpu.memory_space<vmem>>, %arg5: memref<2x32x128xf32, #tpu.memory_space<vmem>>) attributes {dimension_semantics = [#tpu.dimension_semantics<parallel>, #tpu.dimension_semantics<parallel>, #tpu.dimension_semantics<arbitrary>], iteration_bounds = array<i64: 2, 1, 1>, scalar_prefetch = 0 : i64, scratch_operands = 1 : i64, tpu.core_type = #tpu.core_type<tc>, window_params = [{transform_indices = @transform_0, window_bounds = array<i64: 2, 32, 256>}, {transform_indices = @transform_1, window_bounds = array<i64: 1, 2, 32>}]} {
    %c0_i32 = arith.constant 0 : i32
    %0 = arith.cmpi eq, %arg2, %c0_i32 : i32
    %1 = arith.extui %0 : i1 to i32
    %c0_i32_0 = arith.constant 0 : i32
    %2 = arith.cmpi ne, %1, %c0_i32_0 : i32
    scf.if %2 {
      %cst = arith.constant 0.000000e+00 : f32
      %6 = vector.broadcast %cst : f32 to vector<2x32x128xf32>
      %c0 = arith.constant 0 : index
      %c0_3 = arith.constant 0 : index
      %c0_4 = arith.constant 0 : index
      %7 = vector.load %arg5[%c0, %c0_3, %c0_4] : memref<2x32x128xf32, #tpu.memory_space<vmem>>, vector<2x32x128xf32>
      tpu.vector_store %arg5[%c0, %c0_3, %c0_4], %6 {strides = array<i32>} : memref<2x32x128xf32, #tpu.memory_space<vmem>>, vector<2x32x128xf32>,
    } else {
    }
    %c0_i32_1 = arith.constant 0 : i32
    %3 = arith.cmpi eq, %arg2, %c0_i32_1 : i32
    %4 = arith.extui %3 : i1 to i32
    %c0_i32_2 = arith.constant 0 : i32
    %5 = arith.cmpi ne, %4, %c0_i32_2 : i32
    scf.if %5 {
      %c0 = arith.constant 0 : index
      %c0_3 = arith.constant 0 : index
      %c0_4 = arith.constant 0 : index
      %6 = vector.load %arg5[%c0, %c0_3, %c0_4] : memref<2x32x128xf32, #tpu.memory_space<vmem>>, vector<2x32x128xf32>
      %c0_5 = arith.constant 0 : index
      %c0_6 = arith.constant 0 : index
      %c0_7 = arith.constant 0 : index
      %7 = vector.load %arg3[%c0_5, %c0_6, %c0_7] : memref<2x32x256xf32, #tpu.memory_space<vmem>>, vector<2x32x128xf32>
      %8 = arith.addf %6, %7 : vector<2x32x128xf32>
      %c0_8 = arith.constant 0 : index
      %c0_9 = arith.constant 0 : index
      %c0_10 = arith.constant 0 : index
      %9 = vector.load %arg5[%c0_8, %c0_9, %c0_10] : memref<2x32x128xf32, #tpu.memory_space<vmem>>, vector<2x32x128xf32>
      tpu.vector_store %arg5[%c0_8, %c0_9, %c0_10], %8 {strides = array<i32>} : memref<2x32x128xf32, #tpu.memory_space<vmem>>, vector<2x32x128xf32>,
      %c0_11 = arith.constant 0 : index
      %c0_12 = arith.constant 0 : index
      %c0_13 = arith.constant 0 : index
      %10 = vector.load %arg5[%c0_11, %c0_12, %c0_13] : memref<2x32x128xf32, #tpu.memory_space<vmem>>, vector<2x32x128xf32>
      %c0_14 = arith.constant 0 : index
      %c0_15 = arith.constant 0 : index
      %c128 = arith.constant 128 : index
      %11 = vector.load %arg3[%c0_14, %c0_15, %c128] : memref<2x32x256xf32, #tpu.memory_space<vmem>>, vector<2x32x128xf32>
      %12 = arith.addf %10, %11 : vector<2x32x128xf32>
      %c0_16 = arith.constant 0 : index
      %c0_17 = arith.constant 0 : index
      %c0_18 = arith.constant 0 : index
      %13 = vector.load %arg5[%c0_16, %c0_17, %c0_18] : memref<2x32x128xf32, #tpu.memory_space<vmem>>, vector<2x32x128xf32>
      tpu.vector_store %arg5[%c0_16, %c0_17, %c0_18], %12 {strides = array<i32>} : memref<2x32x128xf32, #tpu.memory_space<vmem>>, vector<2x32x128xf32>,
      %c0_19 = arith.constant 0 : index
      %c0_20 = arith.constant 0 : index
      %c0_21 = arith.constant 0 : index
      %14 = vector.load %arg5[%c0_19, %c0_20, %c0_21] : memref<2x32x128xf32, #tpu.memory_space<vmem>>, vector<2x32x128xf32>
      %cst = arith.constant dense<0.000000e+00> : vector<2x32xf32>
      %15 = vector.multi_reduction <add>, %14, %cst [2] : vector<2x32x128xf32> to vector<2x32xf32>
      %cst_22 = arith.constant 3.906250e-03 : f32
      %16 = vector.broadcast %cst_22 : f32 to vector<2x32xf32>
      %17 = arith.mulf %15, %16 : vector<2x32xf32>
      %c0_23 = arith.constant 0 : index
      %c0_24 = arith.constant 0 : index
      %c0_25 = arith.constant 0 : index
      %18 = vector.load %arg4[%c0_23, %c0_24, %c0_25] : memref<1x2x32xf32, #tpu.memory_space<vmem>>, vector<1x2x32xf32>
      %19 = vector.shape_cast %18 : vector<1x2x32xf32> to vector<2x32xf32>
      %20 = vector.shape_cast %17 : vector<2x32xf32> to vector<1x2x32xf32>
      tpu.vector_store %arg4[%c0_23, %c0_24, %c0_25], %20 {strides = array<i32>} : memref<1x2x32xf32, #tpu.memory_space<vmem>>, vector<1x2x32xf32>,
    } else {
    }
    return
  }
  func.func @transform_0(%arg0: i32, %arg1: i32, %arg2: i32) -> (i32, i32, i32) {
    %c0_i32 = arith.constant 0 : i32
    return %arg1, %arg0, %arg2 : i32, i32, i32
  }
  func.func @transform_1(%arg0: i32, %arg1: i32, %arg2: i32) -> (i32, i32, i32) {
    %c0_i32 = arith.constant 0 : i32
    %c0_i32_0 = arith.constant 0 : i32
    return %arg0, %arg1, %c0_i32 : i32, i32, i32
  }
}

</mosaic_0001>

<llo_original>
// kernel: tpu_custom_call.1
$region0: #{tpu_custom_call.1}
  #allocation0 [shape = 'u32[]', space=smem, size = 0x4, offset = 0x4, fixed_abs, tag = 'smem constant byte address 0x4 - core index']
  #allocation1 [shape = 'u32[144,128]{1,0:T(1,128)}', space=vmem, size = 0x12000, scoped, tag = 'internal scratch']
  #allocation2 [shape = 'f32[2,32,128]{2,1,0:T(8,128)}', space=vmem, size = 0x8000, scoped, tag = 'scratch operand']
  #allocation7 [shape = 's32[]', space=sflag, size = 0x4, offset = 0, fixed_abs, tag = 'sflag constant byte address 0x0 - dummy sync flag']
  %s0 = inlined_call_operand.hbm [shape: f32[2,64,256], index: 0, kind: input, shape index: {}]
  %s1 = inlined_call_operand.hbm [shape: f32[2,2,32], index: 1, kind: output, shape index: {}]
  %s2 = sld [smem:[#allocation0]]
  $region45: #{tpu_custom_call.1} parent=0
    _
  %s4 = ssub.s32 1, %s2
  %s5 = scalar_select 0, %s4, %s2
  $region1: #{tpu_custom_call.1} parent=0
    #allocation3 [shape = 'u8[131072]{0}', space=vmem, size = 0x20000, scoped, tag = 'input window, operand 0']
    #allocation4 [shape = 's32[2]{0}', space=sflag, size = 0x8, scoped, tag = 'scoped memory for tpu_custom_call.1']
    #allocation5 [shape = 's32[2]{0}', space=sflag, size = 0x8, scoped, tag = 'scoped memory for tpu_custom_call.1']
    #allocation6 [shape = 'u8[2048]{0}', space=vmem, size = 0x800, scoped, tag = 'output window, operand 0']
    %6 = vsyncpa [#allocation4], 0
    %s7 = scalar_lea.sflag [#allocation4], 1
    %8 = vsyncpa %s7, 0
    %9 = vsyncpa [#allocation5], 0
    %s10 = scalar_lea.sflag [#allocation5], 1
    %11 = vsyncpa %s10, 0
    loop: start=0, step=1, limit=4
    $region2: #{tpu_custom_call.1} parent=1 // loop_pre_header
      _
    $region3: #{tpu_custom_call.1} parent=1 // loop_header
      %s13 = sphi 0, %s17
      %p14 = scmp.ge.s32.totalorder %s13, 4
      %s20 = sphi 0, %s39
      %s21 = sphi 0, %s35
      %s22 = sphi 0, %s31
      %s23 = sphi 0, %s20
      %s24 = sphi 0, %s21
      %s25 = sphi 0, %s22
      %s26 = sphi 0, %s23
      %s27 = sphi 0, %s24
      %s28 = sphi 0, %s25
      %s46 = sphi 0, %s48
      %s49 = sphi 0, %s46
      %s50 = sphi 0, %s49
      %s66 = sphi 0, %s50
      %s74 = sphi 0, %s76
      %s77 = sphi 0, %s74
      %s78 = sphi 0, %s77
      %s94 = sphi 0, %s78
    $region4: #{tpu_custom_call.1} parent=1 // loop_header_branch
      %16 = sbr.rel (%p14) target = $region8
    $region5: #{tpu_custom_call.1} parent=1 // loop_body
      %s18 = ssub.s32 %s13, 1
      %s19 = ssub.s32 %s13, 2
      %s29 = sadd.s32 1, %s22
      %p30 = scmp.ge.s32.totalorder %s29, 1
      %s31 = scalar_select %p30, 0, %s29
      %s32 = sadd.s32 1, %s21
      %s33 = scalar_select %p30, %s32, %s21
      %p34 = scmp.ge.s32.totalorder %s33, 1
      %s35 = scalar_select %p34, 0, %s33
      %s36 = sadd.s32 1, %s20
      %s37 = scalar_select %p34, %s36, %s20
      %p38 = scmp.ge.s32.totalorder %s37, 2
      %s39 = scalar_select %p38, 0, %s37
      %s40 = ssub.s32 %s21, %s35
      %s41 = ssub.s32 %s20, %s39
      %s42 = sor.u32 %s40, %s41
      %s43 = ssub.s32 %s22, %s31
      %s44 = sor.u32 %s42, %s43
      %p45 = scmp.eq.s32.totalorder %s44, 0
      %s47 = sadd.s32 %s46, 1
      %s48 = scalar_select %p45, %s46, %s47
      %p51 = pneg %p45
      %p52 = scmp.eq.s32.totalorder %s13, 1
      %p53 = por %p51, %p52
      %p54 = scmp.ne.s32.totalorder %s46, %s49
      %p55 = scmp.eq.s32.totalorder %s13, 0
      %p56 = por %p54, %p55
      %p57 = scmp.ne.s32.totalorder %s46, %s49
      %p58 = scmp.eq.s32.totalorder %s18, 1
      %p59 = por %p57, %p58
      %p60 = scmp.ne.s32.totalorder %s49, %s50
      %p61 = scmp.eq.s32.totalorder %s18, 0
      %p62 = por %p60, %p61
      %p63 = scmp.ne.s32.totalorder %s49, %s50
      %p64 = scmp.eq.s32.totalorder %s19, 1
      %p65 = por %p63, %p64
      %p67 = scmp.ne.s32.totalorder %s50, %s66
      %p68 = scmp.eq.s32.totalorder %s19, 0
      %p69 = por %p67, %p68
      %s70 = ssub.s32 %s20, %s39
      %s71 = ssub.s32 %s21, %s35
      %s72 = sor.u32 %s70, %s71
      %p73 = scmp.eq.s32.totalorder %s72, 0
      %s75 = sadd.s32 %s74, 1
      %s76 = scalar_select %p73, %s74, %s75
      %p79 = pneg %p73
      %p80 = scmp.eq.s32.totalorder %s13, 1
      %p81 = por %p79, %p80
      %p82 = scmp.ne.s32.totalorder %s74, %s77
      %p83 = scmp.eq.s32.totalorder %s13, 0
      %p84 = por %p82, %p83
      %p85 = scmp.ne.s32.totalorder %s74, %s77
      %p86 = scmp.eq.s32.totalorder %s18, 1
      %p87 = por %p85, %p86
      %p88 = scmp.ne.s32.totalorder %s77, %s78
      %p89 = scmp.eq.s32.totalorder %s18, 0
      %p90 = por %p88, %p89
      %p91 = scmp.ne.s32.totalorder %s77, %s78
      %p92 = scmp.eq.s32.totalorder %s19, 1
      %p93 = por %p91, %p92
      %p95 = scmp.ne.s32.totalorder %s78, %s94
      %p96 = scmp.eq.s32.totalorder %s19, 0
      %p97 = por %p95, %p96
      %p98 = scmp.le.s32.totalorder 1, %s13
      %p99 = scmp.lt.s32.totalorder %s13, 3
      %p100 = pnand %p98, %p99
      %p101 = pneg %p100
      // Predicated region
      $region9: #{tpu_custom_call.1} parent=5 // pred_check
        _
      $region10: #{tpu_custom_call.1} parent=5 // pred_check_branch
        %103 = sbr.rel (%p100) target = $region12
      $region11: #{tpu_custom_call.1} parent=5 // pred_region
        %s104 = ssub.s32 %s13, 1
      $region12: #{tpu_custom_call.1} parent=5 // pred_fallthru
        _
      %p105 = scmp.lt.s32.totalorder %s13, 2
      // Predicated region
      $region13: #{tpu_custom_call.1} parent=5 // pred_check
        %p106 = pneg %p105
      $region14: #{tpu_custom_call.1} parent=5 // pred_check_branch
        %108 = sbr.rel (%p106) target = $region16
      $region15: #{tpu_custom_call.1} parent=5 // pred_region
        // Predicated region
        $region17: #{tpu_custom_call.1} parent=15 // pred_check
          %p109 = pneg %p56
        $region18: #{tpu_custom_call.1} parent=15 // pred_check_branch
          %111 = sbr.rel (%p109) target = $region20
        $region19: #{tpu_custom_call.1} parent=15 // pred_region
          #allocation8 [shape = 'u32[6]{0}', space=smem, size = 0x18, scoped, tag = 'DMA stride descriptor']
          %s112 = sand.u32 %s46, 1
          %s113 = scalar_lea.sflag [#allocation4], %s112
          %s114 = sand.u32 %s46, 1
          %s115 = smul.addr %s114, 128
          %s116 = scalar_lea.vmem [#allocation3], %s115
          %s117 = smul.u32 2, %s21
          %s118 = smul.u32 4, %s20
          %s119 = smul.u32 2, %s22
          %s121 = ssub.s32 2048, 2048
          %122 = vsyncadd %s113, %s121
          %s123 = smul.addr %s118, 2
          %s124 = sadd.s32 %s119, %s123
          %s125 = smul.addr %s117, 16
          %s126 = sadd.s32 %s124, %s125
          %s127 = smul.addr %s126, 128
          %s128 = scalar_lea.hbm %s0, %s127
          %s130 = sshll.u32 1, 14
          %s131 = sxor.u32 4294967295, %s130
          %s133 = sld [smem:[#allocation0]]
          %s134 = sadd.s32 2, %s133
          %s136 = sshll.u32 7, 26
          %s137 = sxor.u32 4294967295, %s136
          %s138 = sand.u32 0, %s137
          %s139 = sshll.u32 %s134, 26
          %s140 = sor.u32 %s138, %s139
          %s141 = sshll.u32 %s116, 4
          %s142 = int_to_ptr.vmem [resolvable:$true] %s141
          %148 = sst [smem:[#allocation8]] 2048
          %s149 = scalar_lea.smem [#allocation8], 1
          %150 = sst [smem:[%s149]] 1024
          %s151 = scalar_lea.smem [#allocation8], 2
          %152 = sst [smem:[%s151]] 4
          %s153 = scalar_lea.smem [#allocation8], 3
          %154 = sst [smem:[%s153]] 256
          %s155 = scalar_lea.smem [#allocation8], 4
          %156 = sst [smem:[%s155]] 256
          %s157 = scalar_lea.smem [#allocation8], 5
          %158 = sst [smem:[%s157]] 16
          %160 = dma.general %s128, 2048, %s142, %s113, [#allocation7], [#allocation8], %s140, 0
        $region20: #{tpu_custom_call.1} parent=15 // pred_fallthru
          _
      $region16: #{tpu_custom_call.1} parent=5 // pred_fallthru
        _
      %p161 = scmp.le.s32.totalorder 1, %s13
      %p162 = scmp.lt.s32.totalorder %s13, 3
      %p163 = pnand %p161, %p162
      %p164 = pneg %p163
      // Predicated region
      $region21: #{tpu_custom_call.1} parent=5 // pred_check
        _
      $region22: #{tpu_custom_call.1} parent=5 // pred_check_branch
        %166 = sbr.rel (%p163) target = $region24
      $region23: #{tpu_custom_call.1} parent=5 // pred_region
        %s167 = ssub.s32 %s13, 1
        %s168 = sand.u32 %s49, 1
        %s169 = scalar_lea.sflag [#allocation4], %s168
        %s170 = sand.u32 %s49, 1
        %s171 = smul.addr %s170, 128
        %s172 = scalar_lea.vmem [#allocation3], %s171
        // Predicated region
        $region25: #{tpu_custom_call.1} parent=23 // pred_check
          %p173 = pneg %p62
        $region26: #{tpu_custom_call.1} parent=23 // pred_check_branch
          %175 = sbr.rel (%p173) target = $region28
        $region27: #{tpu_custom_call.1} parent=23 // pred_region
          %176 = dma.done %s169, 2048
        $region28: #{tpu_custom_call.1} parent=23 // pred_fallthru
          _
        %s177 = sand.u32 %s49, 1
        %s178 = scalar_lea.sflag [#allocation4], %s177
        %s179 = sand.u32 %s49, 1
        %s180 = smul.addr %s179, 128
        %s181 = scalar_lea.vmem [#allocation3], %s180
        %p182 = pneg %p62
        %p183 = pneg %p59
        %p184 = pneg %p90
        %p185 = pneg %p87
        %s186 = sand.u32 %s77, 1
        %s187 = scalar_lea.sflag [#allocation5], %s186
        %s188 = sand.u32 %s77, 1
        %s189 = smul.addr %s188, 2
        %s190 = scalar_lea.vmem [#allocation6], %s189
        %s191 = smul.u32 2, %s24
        %s192 = smul.u32 4, %s23
        %s193 = smul.u32 2, %s25
        %p194 = scmp.eq.s32.totalorder %s25, 0
        // Predicated region
        $region29: #{tpu_custom_call.1} parent=23 // pred_check
          %p195 = pneg %p194
        $region30: #{tpu_custom_call.1} parent=23 // pred_check_branch
          %197 = sbr.rel (%p195) target = $region32
        $region31: #{tpu_custom_call.1} parent=23 // pred_region
          %198 = vst [vmem:[#allocation2] sm:$0xff] 0.0
          %199 = vst [vmem:[#allocation2 + $0x8] sm:$0xff] 0.0
          %200 = vst [vmem:[#allocation2 + $0x10] sm:$0xff] 0.0
          %201 = vst [vmem:[#allocation2 + $0x18] sm:$0xff] 0.0
          %202 = vst [vmem:[#allocation2 + $0x20] sm:$0xff] 0.0
          %203 = vst [vmem:[#allocation2 + $0x28] sm:$0xff] 0.0
          %204 = vst [vmem:[#allocation2 + $0x30] sm:$0xff] 0.0
          %205 = vst [vmem:[#allocation2 + $0x38] sm:$0xff] 0.0
          %v206 = vld [vmem:[#allocation2] sm:$0xff]
          %v207 = vld [vmem:[#allocation2 + $0x8] sm:$0xff]
          %v208 = vld [vmem:[#allocation2 + $0x10] sm:$0xff]
          %v209 = vld [vmem:[#allocation2 + $0x18] sm:$0xff]
          %v210 = vld [vmem:[#allocation2 + $0x20] sm:$0xff]
          %v211 = vld [vmem:[#allocation2 + $0x28] sm:$0xff]
          %v212 = vld [vmem:[#allocation2 + $0x30] sm:$0xff]
          %v213 = vld [vmem:[#allocation2 + $0x38] sm:$0xff]
          %v214 = vld [vmem:[%s172] sm:$0xff]
          %v215 = vld [vmem:[%s172 + $0x10] sm:$0xff]
          %v216 = vld [vmem:[%s172 + $0x20] sm:$0xff]
          %v217 = vld [vmem:[%s172 + $0x30] sm:$0xff]
          %v218 = vld [vmem:[%s172 + $0x40] sm:$0xff]
          %v219 = vld [vmem:[%s172 + $0x50] sm:$0xff]
          %v220 = vld [vmem:[%s172 + $0x60] sm:$0xff]
          %v221 = vld [vmem:[%s172 + $0x70] sm:$0xff]
          %v222 = vadd.f32 %v206, %v214
          %v223 = vadd.f32 %v207, %v215
          %v224 = vadd.f32 %v208, %v216
          %v225 = vadd.f32 %v209, %v217
          %v226 = vadd.f32 %v210, %v218
          %v227 = vadd.f32 %v211, %v219
          %v228 = vadd.f32 %v212, %v220
          %v229 = vadd.f32 %v213, %v221
          %230 = vst [vmem:[#allocation2] sm:$0xff] %v222
          %231 = vst [vmem:[#allocation2 + $0x8] sm:$0xff] %v223
          %232 = vst [vmem:[#allocation2 + $0x10] sm:$0xff] %v224
          %233 = vst [vmem:[#allocation2 + $0x18] sm:$0xff] %v225
          %234 = vst [vmem:[#allocation2 + $0x20] sm:$0xff] %v226
          %235 = vst [vmem:[#allocation2 + $0x28] sm:$0xff] %v227
          %236 = vst [vmem:[#allocation2 + $0x30] sm:$0xff] %v228
          %237 = vst [vmem:[#allocation2 + $0x38] sm:$0xff] %v229
          %v238 = vld [vmem:[#allocation2] sm:$0xff]
          %v239 = vld [vmem:[#allocation2 + $0x8] sm:$0xff]
          %v240 = vld [vmem:[#allocation2 + $0x10] sm:$0xff]
          %v241 = vld [vmem:[#allocation2 + $0x18] sm:$0xff]
          %v242 = vld [vmem:[#allocation2 + $0x20] sm:$0xff]
          %v243 = vld [vmem:[#allocation2 + $0x28] sm:$0xff]
          %v244 = vld [vmem:[#allocation2 + $0x30] sm:$0xff]
          %v245 = vld [vmem:[#allocation2 + $0x38] sm:$0xff]
          %v246 = vld [vmem:[%s172 + $0x8] sm:$0xff]
          %v247 = vld [vmem:[%s172 + $0x18] sm:$0xff]
          %v248 = vld [vmem:[%s172 + $0x28] sm:$0xff]
          %v249 = vld [vmem:[%s172 + $0x38] sm:$0xff]
          %v250 = vld [vmem:[%s172 + $0x48] sm:$0xff]
          %v251 = vld [vmem:[%s172 + $0x58] sm:$0xff]
          %v252 = vld [vmem:[%s172 + $0x68] sm:$0xff]
          %v253 = vld [vmem:[%s172 + $0x78] sm:$0xff]
          %v254 = vadd.f32 %v238, %v246
          %v255 = vadd.f32 %v239, %v247
          %v256 = vadd.f32 %v240, %v248
          %v257 = vadd.f32 %v241, %v249
          %v258 = vadd.f32 %v242, %v250
          %v259 = vadd.f32 %v243, %v251
          %v260 = vadd.f32 %v244, %v252
          %v261 = vadd.f32 %v245, %v253
          %262 = vst [vmem:[#allocation2] sm:$0xff] %v254
          %263 = vst [vmem:[#allocation2 + $0x8] sm:$0xff] %v255
          %264 = vst [vmem:[#allocation2 + $0x10] sm:$0xff] %v256
          %265 = vst [vmem:[#allocation2 + $0x18] sm:$0xff] %v257
          %266 = vst [vmem:[#allocation2 + $0x20] sm:$0xff] %v258
          %267 = vst [vmem:[#allocation2 + $0x28] sm:$0xff] %v259
          %268 = vst [vmem:[#allocation2 + $0x30] sm:$0xff] %v260
          %269 = vst [vmem:[#allocation2 + $0x38] sm:$0xff] %v261
          %v270 = vld [vmem:[#allocation2] sm:$0xff]
          %v271 = vld [vmem:[#allocation2 + $0x8] sm:$0xff]
          %v272 = vld [vmem:[#allocation2 + $0x10] sm:$0xff]
          %v273 = vld [vmem:[#allocation2 + $0x18] sm:$0xff]
          %v274 = vld [vmem:[#allocation2 + $0x20] sm:$0xff]
          %v275 = vld [vmem:[#allocation2 + $0x28] sm:$0xff]
          %v276 = vld [vmem:[#allocation2 + $0x30] sm:$0xff]
          %v277 = vld [vmem:[#allocation2 + $0x38] sm:$0xff]
          %278 = vadd.xlane.f32.xlu0 %v270
          %v279 = vpop.xlane.xlu0 %278
          %280 = vadd.xlane.f32.xlu0 %v271
          %v281 = vpop.xlane.xlu0 %280
          %282 = vadd.xlane.f32.xlu0 %v272
          %v283 = vpop.xlane.xlu0 %282
          %284 = vadd.xlane.f32.xlu0 %v273
          %v285 = vpop.xlane.xlu0 %284
          %286 = vadd.xlane.f32.xlu0 %v274
          %v287 = vpop.xlane.xlu0 %286
          %288 = vadd.xlane.f32.xlu0 %v275
          %v289 = vpop.xlane.xlu0 %288
          %290 = vadd.xlane.f32.xlu0 %v276
          %v291 = vpop.xlane.xlu0 %290
          %292 = vadd.xlane.f32.xlu0 %v277
          %v293 = vpop.xlane.xlu0 %292
          %v294 = vmul.f32 %v279, 0.00390625
          %v295 = vmul.f32 %v281, 0.00390625
          %v296 = vmul.f32 %v283, 0.00390625
          %v297 = vmul.f32 %v285, 0.00390625
          %v298 = vmul.f32 %v287, 0.00390625
          %v299 = vmul.f32 %v289, 0.00390625
          %v300 = vmul.f32 %v291, 0.00390625
          %v301 = vmul.f32 %v293, 0.00390625
          %v310 = vlaneseq
          %v311 = vand.u32 %v310, 127
          %v312 = vlaneseq
          %v313 = vshrl.u32 %v312, 7
          %v314 = vsub.s32 %v311, %v313
          %v315 = vrot.slane %v294, %v314
          %v316 = vadd.s32 %v311, 4294967288
          %v317 = vlaneseq
          %v318 = vshrl.u32 %v317, 7
          %v319 = vsub.s32 %v316, %v318
          %v320 = vrot.slane %v295, %v319
          %vm321 = vcmask 130112
          %v322 = vsel %vm321, %v320, %v315
          %v323 = vadd.s32 %v311, 4294967280
          %v324 = vlaneseq
          %v325 = vshrl.u32 %v324, 7
          %v326 = vsub.s32 %v323, %v325
          %v327 = vrot.slane %v296, %v326
          %vm328 = vcmask 195712
          %v329 = vsel %vm328, %v327, %v322
          %v330 = vadd.s32 %v311, 4294967272
          %v331 = vlaneseq
          %v332 = vshrl.u32 %v331, 7
          %v333 = vsub.s32 %v330, %v332
          %v334 = vrot.slane %v297, %v333
          %vm335 = vcmask 261312
          %v336 = vsel %vm335, %v334, %v329
          %v337 = vlaneseq
          %v338 = vshrl.u32 %v337, 7
          %v339 = vsub.s32 %v311, %v338
          %v340 = vrot.slane %v298, %v339
          %v341 = vlaneseq
          %v342 = vshrl.u32 %v341, 7
          %v343 = vsub.s32 %v316, %v342
          %v344 = vrot.slane %v299, %v343
          %v345 = vsel %vm321, %v344, %v340
          %v346 = vlaneseq
          %v347 = vshrl.u32 %v346, 7
          %v348 = vsub.s32 %v323, %v347
          %v349 = vrot.slane %v300, %v348
          %v350 = vsel %vm328, %v349, %v345
          %v351 = vlaneseq
          %v352 = vshrl.u32 %v351, 7
          %v353 = vsub.s32 %v330, %v352
          %v354 = vrot.slane %v301, %v353
          %v355 = vsel %vm335, %v354, %v350
          %vm356 = vcmask 1041409
          %v357 = vsel %vm356, %v355, %v336
          %vm359 = vcmask 254976
          %360 = vst.msk [vmem:[%s190] sm:$0x3] %vm359, %v357
        $region32: #{tpu_custom_call.1} parent=23 // pred_fallthru
          _
        %s361 = sand.u32 %s77, 1
        %s362 = scalar_lea.sflag [#allocation5], %s361
        %s363 = sand.u32 %s77, 1
        %s364 = smul.addr %s363, 2
        %s365 = scalar_lea.vmem [#allocation6], %s364
        // Predicated region
        $region33: #{tpu_custom_call.1} parent=23 // pred_check
          %p366 = pneg %p87
        $region34: #{tpu_custom_call.1} parent=23 // pred_check_branch
          %368 = sbr.rel (%p366) target = $region36
        $region35: #{tpu_custom_call.1} parent=23 // pred_region
          %s370 = ssub.s32 32, 32
          %371 = vsyncadd %s362, %s370
          %s372 = sadd.s32 %s24, %s23
          %s373 = smul.addr %s372, 32
          %s374 = scalar_lea.hbm %s1, %s373
          %s376 = sshll.u32 %s365, 4
          %s377 = int_to_ptr.vmem [resolvable:$true] %s376
          %379 = dma.vmem_to_hbm [thread:$0]  %s377, 32, %s374, %s362
        $region36: #{tpu_custom_call.1} parent=23 // pred_fallthru
          _
      $region24: #{tpu_custom_call.1} parent=5 // pred_fallthru
        _
      %p380 = scmp.le.s32.totalorder 2, %s13
      // Predicated region
      $region37: #{tpu_custom_call.1} parent=5 // pred_check
        %p381 = pneg %p380
      $region38: #{tpu_custom_call.1} parent=5 // pred_check_branch
        %383 = sbr.rel (%p381) target = $region40
      $region39: #{tpu_custom_call.1} parent=5 // pred_region
        %s384 = ssub.s32 %s13, 2
        // Predicated region
        $region41: #{tpu_custom_call.1} parent=39 // pred_check
          %p385 = pneg %p93
        $region42: #{tpu_custom_call.1} parent=39 // pred_check_branch
          %387 = sbr.rel (%p385) target = $region44
        $region43: #{tpu_custom_call.1} parent=39 // pred_region
          %s388 = sand.u32 %s78, 1
          %s389 = scalar_lea.sflag [#allocation5], %s388
          %s390 = sand.u32 %s78, 1
          %s391 = smul.addr %s390, 2
          %s392 = scalar_lea.vmem [#allocation6], %s391
          %393 = dma.done %s389, 32
        $region44: #{tpu_custom_call.1} parent=39 // pred_fallthru
          _
      $region40: #{tpu_custom_call.1} parent=5 // pred_fallthru
        _
    $region6: #{tpu_custom_call.1} parent=1 // loop_footer
      %s17 = sadd.s32 1, %s13
    $region7: #{tpu_custom_call.1} parent=1 // loop_footer_branch
      %12 = sbr.rel target = $region3
    $region8: #{tpu_custom_call.1} parent=1 // loop_exit
      _
    %394 = vsyncpa [#allocation4], 1
    %s395 = scalar_lea.sflag [#allocation4], 1
    %396 = vsyncpa %s395, 1
    %397 = vsyncpa [#allocation5], 1
    %s398 = scalar_lea.sflag [#allocation5], 1
    %399 = vsyncpa %s398, 1

</llo_original>
